<compile_context>
chip_gen: v7x
topology: tpu7x:2x2x1
jax: 0.10.0
libtpu: 0.0.40
codegen_flags: <defaults>
</compile_context>

<pallas_src>
import jax
import jax.numpy as jnp
from jax.experimental import pallas as pl
from jax.experimental.pallas import tpu as pltpu

N_INPUT = 2
N_HIDDEN = 2

_LANES = 128          # TPU lane width
_SUBLANES = 8         # f32 sublane packing
_TARGET_ROWS = 2048   # 2048 rows x 128 lanes = 256K batch elems per tile


def _mlp_kernel(w1_ref, w2_ref, x_ref, o_ref):
    # w1_ref: SMEM [4]  = W1 row-major [[w00, w01], [w10, w11]]
    # w2_ref: SMEM [2]  = W2 row-major [[v0, v1]]
    # x_ref : VMEM [2, rt, 128]   (batch dense over sublanes & lanes)
    # o_ref : VMEM [rt, 128]
    x0 = x_ref[0]                     # (rt, 128), fully packed vregs
    x1 = x_ref[1]

    w00 = w1_ref[0]
    w01 = w1_ref[1]
    w10 = w1_ref[2]
    w11 = w1_ref[3]
    v0 = w2_ref[0]
    v1 = w2_ref[1]

    # Layer 1 + ReLU (pure VPU FMAs, no MXU)
    h0 = jnp.maximum(x0 * w00 + x1 * w01, 0.0)
    h1 = jnp.maximum(x0 * w10 + x1 * w11, 0.0)
    # Layer 2
    z = h0 * v0 + h1 * v1
    # softplus, PyTorch default (beta=1, threshold=20): z > 20 -> identity.
    # No min-clamp needed: the overflowed log1p(exp(z)) branch is discarded.
    o_ref[...] = jnp.where(z > 20.0, z, jnp.log1p(jnp.exp(z))).astype(o_ref.dtype)


def feed_forward_pallas(x, w1, w2, *, target_rows=_TARGET_ROWS):
    """x: [B, 2]; w1: [2, 2]; w2: [1, 2] (PyTorch nn.Linear weight layout, bias=False)."""
    B, n_in = x.shape
    n_hid = w1.shape[0]
    assert w1.shape == (n_hid, n_in) and w2.shape == (1, n_hid)
    assert n_in == N_INPUT and n_hid == N_HIDDEN

    # Pad batch only up to (8 sublanes x 128 lanes) granularity.
    rows = pl.cdiv(B, _LANES)
    rows = pl.cdiv(rows, _SUBLANES) * _SUBLANES
    b_pad = rows * _LANES

    # Lane- & sublane-dense layout: [B, 2] -> [2, B] -> [2, rows, 128].
    # TODO(synk): ideally the producer emits x already as [2, B] (or bf16) so this
    # transpose/pad pass (an extra HBM read+write of x) disappears entirely.
    x_t = jnp.transpose(x).astype(jnp.float32)
    if b_pad != B:
        x_t = jnp.pad(x_t, ((0, 0), (0, b_pad - B)))
    x_t = x_t.reshape(n_in, rows, _LANES)          # free, row-major preserving

    rt = min(int(target_rows), int(rows))          # both multiples of 8
    grid = (pl.cdiv(rows, rt),)                    # ragged last block is masked by Pallas

    out = pl.pallas_call(
        _mlp_kernel,
        out_shape=jax.ShapeDtypeStruct((rows, _LANES), jnp.float32),
        grid_spec=pltpu.PrefetchScalarGridSpec(
            num_scalar_prefetch=2,                 # w1, w2 -> SMEM
            grid=grid,
            in_specs=[pl.BlockSpec((n_in, rt, _LANES),
                                   lambda i, w1s, w2s: (0, i, 0))],
            out_specs=pl.BlockSpec((rt, _LANES),
                                   lambda i, w1s, w2s: (i, 0)),
        ),
        compiler_params=pltpu.CompilerParams(
            dimension_semantics=("parallel",)),    # megacore sharding on v7x
    )(w1.reshape(-1).astype(jnp.float32),
      w2.reshape(-1).astype(jnp.float32),
      x_t)

    flat = out.reshape(-1)                         # free bitcast
    if b_pad != B:
        flat = flat[:B]                            # drop padded lanes (softplus(0) junk)
    return flat.reshape(B, 1)


def _reference(x, w1, w2):
    h = jnp.maximum(x @ w1.T, 0.0)
    z = h @ w2.T
    return jnp.where(z > 20.0, z, jnp.log1p(jnp.exp(jnp.minimum(z, 20.0))))


if __name__ == "__main__":
    key = jax.random.PRNGKey(0)
    kx, k1, k2 = jax.random.split(key, 3)

    # Deterministic init mimicking nn.Linear default: U(-1/sqrt(fan_in), 1/sqrt(fan_in)).
    b1 = 1.0 / jnp.sqrt(float(N_INPUT))
    b2 = 1.0 / jnp.sqrt(float(N_HIDDEN))
    w1 = jax.random.uniform(k1, (N_HIDDEN, N_INPUT), jnp.float32, -b1, b1)
    w2 = jax.random.uniform(k2, (1, N_HIDDEN), jnp.float32, -b2, b2)

    # Small batches: one that fits a single 8x128 row block, one exercising lane padding.
    for B in (8, 300):
        x = jax.random.normal(jax.random.fold_in(kx, B), (B, N_INPUT), dtype=jnp.float32)
        out = jax.block_until_ready(feed_forward_pallas(x, w1, w2))
        ref = _reference(x, w1, w2)
        assert out.shape == (B, 1), out.shape
        assert jnp.allclose(out, ref, atol=1e-5, rtol=1e-5), (out, ref)

    print("KERNEL_OK")
</pallas_src>

<mosaic_0001>
module attributes {stable_mosaic.version = 11 : i64} {
  func.func @_mlp_kernel(%arg0: i32, %arg1: memref<4xf32, #tpu.memory_space<smem>>, %arg2: memref<2xf32, #tpu.memory_space<smem>>, %arg3: memref<2x8x128xf32, #tpu.memory_space<vmem>>, %arg4: memref<8x128xf32, #tpu.memory_space<vmem>>) attributes {dimension_semantics = [#tpu.dimension_semantics<parallel>], iteration_bounds = array<i64: 1>, scalar_prefetch = 2 : i64, scratch_operands = 0 : i64, tpu.core_type = #tpu.core_type<tc>, window_params = [{transform_indices = @transform_0, window_bounds = array<i64: 2, 8, 128>}, {transform_indices = @transform_1, window_bounds = array<i64: 8, 128>}]} {
    %c0 = arith.constant 0 : index
    %c0_0 = arith.constant 0 : index
    %c0_1 = arith.constant 0 : index
    %0 = vector.load %arg3[%c0, %c0_0, %c0_1] : memref<2x8x128xf32, #tpu.memory_space<vmem>>, vector<1x8x128xf32>
    %1 = vector.shape_cast %0 : vector<1x8x128xf32> to vector<8x128xf32>
    %c1 = arith.constant 1 : index
    %c0_2 = arith.constant 0 : index
    %c0_3 = arith.constant 0 : index
    %2 = vector.load %arg3[%c1, %c0_2, %c0_3] : memref<2x8x128xf32, #tpu.memory_space<vmem>>, vector<1x8x128xf32>
    %3 = vector.shape_cast %2 : vector<1x8x128xf32> to vector<8x128xf32>
    %c0_4 = arith.constant 0 : index
    %4 = memref.load %arg1[%c0_4] : memref<4xf32, #tpu.memory_space<smem>>
    %c1_5 = arith.constant 1 : index
    %5 = memref.load %arg1[%c1_5] : memref<4xf32, #tpu.memory_space<smem>>
    %c2 = arith.constant 2 : index
    %6 = memref.load %arg1[%c2] : memref<4xf32, #tpu.memory_space<smem>>
    %c3 = arith.constant 3 : index
    %7 = memref.load %arg1[%c3] : memref<4xf32, #tpu.memory_space<smem>>
    %c0_6 = arith.constant 0 : index
    %8 = memref.load %arg2[%c0_6] : memref<2xf32, #tpu.memory_space<smem>>
    %c1_7 = arith.constant 1 : index
    %9 = memref.load %arg2[%c1_7] : memref<2xf32, #tpu.memory_space<smem>>
    %10 = vector.broadcast %4 : f32 to vector<8x128xf32>
    %11 = arith.mulf %1, %10 : vector<8x128xf32>
    %12 = vector.broadcast %5 : f32 to vector<8x128xf32>
    %13 = arith.mulf %3, %12 : vector<8x128xf32>
    %14 = arith.addf %11, %13 : vector<8x128xf32>
    %cst = arith.constant 0.000000e+00 : f32
    %15 = vector.broadcast %cst : f32 to vector<8x128xf32>
    %16 = arith.maximumf %14, %15 : vector<8x128xf32>
    %17 = vector.broadcast %6 : f32 to vector<8x128xf32>
    %18 = arith.mulf %1, %17 : vector<8x128xf32>
    %19 = vector.broadcast %7 : f32 to vector<8x128xf32>
    %20 = arith.mulf %3, %19 : vector<8x128xf32>
    %21 = arith.addf %18, %20 : vector<8x128xf32>
    %cst_8 = arith.constant 0.000000e+00 : f32
    %22 = vector.broadcast %cst_8 : f32 to vector<8x128xf32>
    %23 = arith.maximumf %21, %22 : vector<8x128xf32>
    %24 = vector.broadcast %8 : f32 to vector<8x128xf32>
    %25 = arith.mulf %16, %24 : vector<8x128xf32>
    %26 = vector.broadcast %9 : f32 to vector<8x128xf32>
    %27 = arith.mulf %23, %26 : vector<8x128xf32>
    %28 = arith.addf %25, %27 : vector<8x128xf32>
    %cst_9 = arith.constant 2.000000e+01 : f32
    %29 = vector.broadcast %cst_9 : f32 to vector<8x128xf32>
    %30 = arith.cmpf ogt, %28, %29 : vector<8x128xf32>
    %31 = math.exp %28 : vector<8x128xf32>
    %32 = math.log1p %31 : vector<8x128xf32>
    %33 = arith.select %30, %28, %32 : vector<8x128xi1>, vector<8x128xf32>
    %c0_10 = arith.constant 0 : index
    %c0_11 = arith.constant 0 : index
    %34 = vector.load %arg4[%c0_10, %c0_11] : memref<8x128xf32, #tpu.memory_space<vmem>>, vector<8x128xf32>
    tpu.vector_store %arg4[%c0_10, %c0_11], %33 {strides = array<i32>} : memref<8x128xf32, #tpu.memory_space<vmem>>, vector<8x128xf32>,
    return
  }
  func.func @transform_0(%arg0: i32, %arg1: memref<4xf32, #tpu.memory_space<smem>>, %arg2: memref<2xf32, #tpu.memory_space<smem>>) -> (i32, i32, i32) {
    %c0_i32 = arith.constant 0 : i32
    %c0_i32_0 = arith.constant 0 : i32
    %c0_i32_1 = arith.constant 0 : i32
    return %c0_i32, %arg0, %c0_i32_0 : i32, i32, i32
  }
  func.func @transform_1(%arg0: i32, %arg1: memref<4xf32, #tpu.memory_space<smem>>, %arg2: memref<2xf32, #tpu.memory_space<smem>>) -> (i32, i32) {
    %c0_i32 = arith.constant 0 : i32
    %c0_i32_0 = arith.constant 0 : i32
    return %arg0, %c0_i32 : i32, i32
  }
}

</mosaic_0001>

<llo_original>
// kernel: tpu_custom_call.1
$region0: #{tpu_custom_call.1}
  #allocation0 [shape = 'u32[]', space=smem, size = 0x4, offset = 0x4, fixed_abs, tag = 'smem constant byte address 0x4 - core index']
  #allocation1 [shape = 'u32[144,128]{1,0:T(1,128)}', space=vmem, size = 0x12000, scoped, tag = 'internal scratch']
  #allocation2 [shape = 's32[1]{0}', space=sflag, size = 0x4, scoped, tag = 'scoped memory for tpu_custom_call.1']
  #allocation3 [shape = 'u8[512]{0}', space=smem, size = 0x200, scoped, tag = 'prefetched SMEM operand 0']
  #allocation4 [shape = 'u8[512]{0}', space=smem, size = 0x200, scoped, tag = 'prefetched SMEM operand 1']
  %s0 = inlined_call_operand.hbm [shape: f32[4], index: 0, kind: input, shape index: {}]
  %s1 = inlined_call_operand.vmem [shape: f32[2], index: 1, kind: input, shape index: {}]
  %s2 = inlined_call_operand.hbm [shape: f32[2,8,128], index: 2, kind: input, shape index: {}]
  %s3 = inlined_call_operand.hbm [shape: f32[8,128], index: 3, kind: output, shape index: {}]
  %s4 = sld [smem:[#allocation0]]
  $region18: #{tpu_custom_call.1} parent=0
    _
  %s6 = ssub.s32 1, %s4
  %s7 = scalar_select 0, %s6, %s4
  %9 = dma.hbm_to_smem %s0, 16, [#allocation3], [#allocation2]
  %s10 = sshll.u32 %s1, 4
  %s11 = int_to_ptr.vmem [resolvable:$true] %s10
  %13 = dma.vmem_to_smem %s11, 16, [#allocation4], [#allocation2]
  %14 = dma.done [#allocation2], 32
  %15 = sfence
  $region1: #{tpu_custom_call.1} parent=0
    #allocation5 [shape = 'u8[8192]{0}', space=vmem, size = 0x2000, scoped, tag = 'input window, operand 2, single buffered']
    #allocation6 [shape = 's32[1]{0}', space=sflag, size = 0x4, scoped, tag = 'scoped memory for tpu_custom_call.1']
    #allocation7 [shape = 's32[1]{0}', space=sflag, size = 0x4, scoped, tag = 'scoped memory for tpu_custom_call.1']
    #allocation8 [shape = 'u8[4096]{0}', space=vmem, size = 0x1000, scoped, tag = 'output window, operand 0, single buffered']
    %16 = vsyncpa [#allocation6], 0
    %17 = vsyncpa [#allocation7], 0
    // Predicated region
    $region2: #{tpu_custom_call.1} parent=1 // pred_check
      _
    $region3: #{tpu_custom_call.1} parent=1 // pred_check_branch
      %19 = sbr.rel (0) target = $region5
    $region4: #{tpu_custom_call.1} parent=1 // pred_region
      %s21 = ssub.s32 256, 256
      %22 = vsyncadd [#allocation6], %s21
      %s23 = sshll.u32 [#allocation5], 4
      %s24 = int_to_ptr.vmem [resolvable:$true] %s23
      %29 = dma.hbm_to_vmem [thread:$0]  %s2, 256, %s24, [#allocation6], 128, 128, 8
    $region5: #{tpu_custom_call.1} parent=1 // pred_fallthru
      _
    // Predicated region
    $region6: #{tpu_custom_call.1} parent=1 // pred_check
      _
    $region7: #{tpu_custom_call.1} parent=1 // pred_check_branch
      %31 = sbr.rel (0) target = $region9
    $region8: #{tpu_custom_call.1} parent=1 // pred_region
      %32 = dma.done [#allocation6], 256
    $region9: #{tpu_custom_call.1} parent=1 // pred_fallthru
      _
    %v33 = vld [vmem:[#allocation5] sm:$0xff]
    %s34 = scalar_lea.vmem [#allocation5], 8
    %v35 = vld [vmem:[%s34] sm:$0xff]
    %s36 = sld [smem:[#allocation3]]
    %s37 = sld [smem:[#allocation3 + $0x1]]
    %s38 = sld [smem:[#allocation3 + $0x2]]
    %s39 = sld [smem:[#allocation3 + $0x3]]
    %s40 = sld [smem:[#allocation4]]
    %s41 = sld [smem:[#allocation4 + $0x1]]
    %v42 = vstv %s36
    %v43 = vmul.f32 %v33, %v42
    %v44 = vstv %s37
    %v45 = vmul.f32 %v35, %v44
    %v46 = vadd.f32 %v43, %v45
    %v47 = vmax.f32 %v46, 0.0
    %v48 = vstv %s38
    %v49 = vmul.f32 %v33, %v48
    %v50 = vstv %s39
    %v51 = vmul.f32 %v35, %v50
    %v52 = vadd.f32 %v49, %v51
    %v53 = vmax.f32 %v52, 0.0
    %v54 = vstv %s40
    %v55 = vmul.f32 %v47, %v54
    %v56 = vstv %s41
    %v57 = vmul.f32 %v53, %v56
    %v58 = vadd.f32 %v55, %v57
    %vm59 = vcmp.gt.f32.partialorder %v58, 20.0
    %v60 = vmul.f32 %v58, 1.442695
    %v61 = vpow.pop %v60
    %v62 = vadd.f32 %v61, 1.0
    %v63 = vlog2.pop %v62
    %v64 = vmul.f32 %v63, 0.6931472
    %v65 = vmul.f32 -0.5, %v61
    %v66 = vadd.f32 %v65, 1.0
    %v67 = vmul.f32 %v66, %v61
    %v68 = vand.u32 2147483647, %v61
    %vm69 = vcmp.lt.f32.partialorder %v68, 0.0004427343
    %v70 = vsel %vm69, %v67, %v64
    %v71 = vsel %vm59, %v58, %v70
    %72 = vst [vmem:[#allocation8] sm:$0xff] %v71
    // Predicated region
    $region10: #{tpu_custom_call.1} parent=1 // pred_check
      _
    $region11: #{tpu_custom_call.1} parent=1 // pred_check_branch
      %74 = sbr.rel (0) target = $region13
    $region12: #{tpu_custom_call.1} parent=1 // pred_region
      %s76 = ssub.s32 128, 128
      %77 = vsyncadd [#allocation7], %s76
      %s79 = sshll.u32 [#allocation8], 4
      %s80 = int_to_ptr.vmem [resolvable:$true] %s79
      %82 = dma.vmem_to_hbm [thread:$0]  %s80, 128, %s3, [#allocation7]
    $region13: #{tpu_custom_call.1} parent=1 // pred_fallthru
      _
    // Predicated region
    $region14: #{tpu_custom_call.1} parent=1 // pred_check
      _
    $region15: #{tpu_custom_call.1} parent=1 // pred_check_branch
      %84 = sbr.rel (0) target = $region17
    $region16: #{tpu_custom_call.1} parent=1 // pred_region
      %85 = dma.done [#allocation7], 128
    $region17: #{tpu_custom_call.1} parent=1 // pred_fallthru
      _
    %86 = vsyncpa [#allocation6], 1
    %87 = vsyncpa [#allocation7], 1

</llo_original>
